<compile_context>
chip_gen: v7x
topology: tpu7x:2x2x1
jax: 0.10.0
libtpu: 0.0.40
codegen_flags: <defaults>
</compile_context>

<pallas_src>
import functools

import jax
import jax.numpy as jnp
from jax.experimental import pallas as pl
from jax.experimental.pallas import tpu as pltpu


_LN_EPS = 1e-12  # BERT LayerNorm epsilon


# ----------------------------- in-kernel helpers -----------------------------

def _layernorm(z, g, b):
    # f32 LayerNorm over the last (lane) axis.
    mean = jnp.mean(z, axis=-1, keepdims=True)
    var = jnp.mean((z - mean) ** 2, axis=-1, keepdims=True)
    return (z - mean) * jax.lax.rsqrt(var + _LN_EPS) * g + b


def _gelu_tanh(h):
    # tanh-approx GELU in f32 (EUP tanh; v5e has no bf16 EUP).
    # TODO(synk): HF BERT uses exact erf-GELU; tanh approx is numerically close.
    c = jnp.float32(0.7978845608028654)  # sqrt(2/pi)
    return 0.5 * h * (1.0 + jnp.tanh(c * (h + 0.044715 * h * h * h)))


# ------------------------------- Pallas kernels -------------------------------

def _embed_ln_kernel(tok_ref, pos_ref, typ_ref, g_ref, b_ref, o_ref):
    # o = LayerNorm(tok + pos + typ)   (typ is one (1, H) row, broadcast)
    z = tok_ref[...] + pos_ref[...] + typ_ref[...]
    o_ref[...] = _layernorm(z, g_ref[...], b_ref[...])


def _qkv_kernel(x_ref, w_ref, b_ref, o_ref):
    # Fused Q|K|V projection: o = bf16(x @ Wqkv + b), Wqkv is (H, 3H) bf16.
    acc = jnp.dot(x_ref[...].astype(jnp.bfloat16), w_ref[...],
                  preferred_element_type=jnp.float32)
    o_ref[...] = (acc + b_ref[...]).astype(jnp.bfloat16)


def _attention_kernel(qkv_ref, o_ref, *, num_heads, head_dim):
    # One batch element per grid step.  qkv_ref: (S, 3H) bf16 laid out [Q|K|V].
    # Heads are sliced out of the lane dimension inside the kernel (no JAX
    # transposes); scores/softmax are f32, matmuls are bf16 on the MXU.
    # TODO(synk): no padding (attention) mask — matches calling bert(x) with
    # the default all-ones mask; add a mask input for padded caption batches.
    hidden = num_heads * head_dim
    qkv = qkv_ref[...]                                   # (S, 3H) bf16
    scale = jnp.float32(1.0 / float(head_dim) ** 0.5)
    for h in range(num_heads):
        lo = h * head_dim
        qh = qkv[:, lo:lo + head_dim]                    # (S, DH)
        kh = qkv[:, hidden + lo:hidden + lo + head_dim]
        vh = qkv[:, 2 * hidden + lo:2 * hidden + lo + head_dim]
        # scores = q @ k^T / sqrt(DH)   (contract last dims, no materialized .T)
        s = jax.lax.dot_general(qh, kh, (((1,), (1,)), ((), ())),
                                preferred_element_type=jnp.float32) * scale
        m = jnp.max(s, axis=-1, keepdims=True)
        p = jnp.exp(s - m)
        inv = pl.reciprocal(jnp.sum(p, axis=-1, keepdims=True), approx=True)
        p = (p * inv).astype(jnp.bfloat16)
        ctx_h = jnp.dot(p, vh, preferred_element_type=jnp.float32)   # (S, DH)
        o_ref[:, lo:lo + head_dim] = ctx_h.astype(jnp.bfloat16)


def _proj_add_ln_kernel(ctx_ref, w_ref, b_ref, res_ref, g_ref, beta_ref, o_ref):
    # o = LayerNorm(resid + ctx @ Wo + bo)
    acc = jnp.dot(ctx_ref[...], w_ref[...], preferred_element_type=jnp.float32)
    z = acc + b_ref[...] + res_ref[...]
    o_ref[...] = _layernorm(z, g_ref[...], beta_ref[...])


def _ffn_kernel(x_ref, wi_ref, bi_ref, wd_ref, bd_ref, g_ref, b_ref, o_ref):
    # o = LayerNorm(x + GELU(x @ Wi + bi) @ Wd + bd)
    # The (rows, FFN) intermediate lives only in VMEM.
    x = x_ref[...]
    h1 = jnp.dot(x.astype(jnp.bfloat16), wi_ref[...],
                 preferred_element_type=jnp.float32) + bi_ref[...]
    h1 = _gelu_tanh(h1)                                  # f32 transcendental
    h2 = jnp.dot(h1.astype(jnp.bfloat16), wd_ref[...],
                 preferred_element_type=jnp.float32) + bd_ref[...]
    o_ref[...] = _layernorm(h2 + x, g_ref[...], b_ref[...])


# ------------------------------ kernel wrappers -------------------------------

def _cp(n_axes=1):
    return pltpu.CompilerParams(dimension_semantics=("parallel",) * n_axes)


def _pick_row_tile(m, max_tile=256):
    """Largest multiple of 8 that divides m and is <= max_tile (else m)."""
    if m <= max_tile:
        return m
    for t in range(max_tile - (max_tile % 8), 7, -8):
        if m % t == 0:
            return t
    return m


def pallas_embed_ln(tok, pos, typ, g, b, tm):
    M, H = tok.shape
    row = pl.BlockSpec((tm, H), lambda i: (i, 0))
    rep = pl.BlockSpec((1, H), lambda i: (0, 0))
    return pl.pallas_call(
        _embed_ln_kernel,
        out_shape=jax.ShapeDtypeStruct((M, H), jnp.float32),
        grid=(M // tm,),
        in_specs=[row, row, rep, rep, rep],
        out_specs=row,
        compiler_params=_cp(),
    )(tok, pos, typ, g, b)


def pallas_qkv(x, w, b, tm):
    M, H = x.shape
    N = w.shape[1]  # 3H
    return pl.pallas_call(
        _qkv_kernel,
        out_shape=jax.ShapeDtypeStruct((M, N), jnp.bfloat16),
        grid=(M // tm,),
        in_specs=[pl.BlockSpec((tm, H), lambda i: (i, 0)),
                  pl.BlockSpec((H, N), lambda i: (0, 0)),
                  pl.BlockSpec((1, N), lambda i: (0, 0))],
        out_specs=pl.BlockSpec((tm, N), lambda i: (i, 0)),
        compiler_params=_cp(),
    )(x, w, b)


def pallas_attention(qkv, batch, seq, hidden, num_heads):
    M = batch * seq
    head_dim = hidden // num_heads
    kernel = functools.partial(_attention_kernel,
                               num_heads=num_heads, head_dim=head_dim)
    return pl.pallas_call(
        kernel,
        out_shape=jax.ShapeDtypeStruct((M, hidden), jnp.bfloat16),
        grid=(batch,),
        in_specs=[pl.BlockSpec((seq, 3 * hidden), lambda b: (b, 0))],
        out_specs=pl.BlockSpec((seq, hidden), lambda b: (b, 0)),
        compiler_params=_cp(),
    )(qkv)


def pallas_proj_add_ln(ctx, w, b, resid, g, beta, tm):
    M, H = resid.shape
    row_b = pl.BlockSpec((tm, H), lambda i: (i, 0))
    rep = pl.BlockSpec((1, H), lambda i: (0, 0))
    return pl.pallas_call(
        _proj_add_ln_kernel,
        out_shape=jax.ShapeDtypeStruct((M, H), jnp.float32),
        grid=(M // tm,),
        in_specs=[row_b,                                   # ctx (bf16)
                  pl.BlockSpec((H, H), lambda i: (0, 0)),  # Wo (bf16)
                  rep,                                     # bo
                  row_b,                                   # residual (f32)
                  rep, rep],                               # gamma, beta
        out_specs=row_b,
        compiler_params=_cp(),
    )(ctx, w, b, resid, g, beta)


def pallas_ffn(x, wi, bi, wd, bd, g, b, tm):
    M, H = x.shape
    F = wi.shape[1]
    row = pl.BlockSpec((tm, H), lambda i: (i, 0))
    rep_h = pl.BlockSpec((1, H), lambda i: (0, 0))
    return pl.pallas_call(
        _ffn_kernel,
        out_shape=jax.ShapeDtypeStruct((M, H), jnp.float32),
        grid=(M // tm,),
        in_specs=[row,
                  pl.BlockSpec((H, F), lambda i: (0, 0)),
                  pl.BlockSpec((1, F), lambda i: (0, 0)),
                  pl.BlockSpec((F, H), lambda i: (0, 0)),
                  rep_h, rep_h, rep_h],
        out_specs=row,
        compiler_params=_cp(),
    )(x, wi, bi, wd, bd, g, b)


# --------------------------------- model glue ---------------------------------

def _bert_layer(h, p, batch, seq, hidden, num_heads, tm):
    qkv = pallas_qkv(h, p["w_qkv"], p["b_qkv"], tm)             # (M, 3H) bf16
    ctx = pallas_attention(qkv, batch, seq, hidden, num_heads)  # (M, H) bf16
    h = pallas_proj_add_ln(ctx, p["wo"], p["bo"], h, p["ln1_g"], p["ln1_b"], tm)
    h = pallas_ffn(h, p["wi"], p["bi"], p["wd"], p["bd"],
                   p["ln2_g"], p["ln2_b"], tm)
    return h


def caption_encoder(token_ids, params, num_heads, row_tile=None):
    """BERT encoder forward; returns last_hidden_state[:, 0, :] (CLS token)."""
    B, S = token_ids.shape
    H = params["tok_emb"].shape[1]
    M = B * S
    tm = row_tile if row_tile is not None else _pick_row_tile(M)
    assert M % tm == 0 and S % 8 == 0

    # Embedding gather has no clean tiled-Pallas form at this size -> JAX glue.
    tok = jnp.take(params["tok_emb"], token_ids.reshape(-1), axis=0)  # (M, H)
    pos = jnp.tile(params["pos_emb"][:S], (B, 1))                      # (M, H)
    typ = params["typ_emb"][0:1]                                       # (1, H)
    h = pallas_embed_ln(tok, pos, typ, params["emb_ln_g"], params["emb_ln_b"], tm)

    for lp in params["layers"]:
        h = _bert_layer(h, lp, B, S, H, num_heads, tm)

    return h.reshape(B, S, H)[:, 0, :]  # == bert(x).last_hidden_state[:, 0, :]


# ------------------------------ parameter init --------------------------------

def init_params(key, vocab, max_pos, hidden, ffn, n_layers):
    # TODO(synk): synthetic weights, not the pretrained cl-tohoku checkpoint.
    def nrm(k, shape, dtype=jnp.float32):
        return (0.02 * jax.random.normal(k, shape, dtype=jnp.float32)).astype(dtype)

    keys = jax.random.split(key, 3 + n_layers)
    params = {
        "tok_emb": nrm(keys[0], (vocab, hidden)),
        "pos_emb": nrm(keys[1], (max_pos, hidden)),
        "typ_emb": nrm(keys[2], (2, hidden)),
        "emb_ln_g": jnp.ones((1, hidden), jnp.float32),
        "emb_ln_b": jnp.zeros((1, hidden), jnp.float32),
        "layers": [],
    }
    for i in range(n_layers):
        lk = jax.random.split(keys[3 + i], 4)
        params["layers"].append({
            # fused Q|K|V projection (one matmul instead of three)
            "w_qkv": nrm(lk[0], (hidden, 3 * hidden), jnp.bfloat16),
            "b_qkv": jnp.zeros((1, 3 * hidden), jnp.float32),
            "wo": nrm(lk[1], (hidden, hidden), jnp.bfloat16),
            "bo": jnp.zeros((1, hidden), jnp.float32),
            "ln1_g": jnp.ones((1, hidden), jnp.float32),
            "ln1_b": jnp.zeros((1, hidden), jnp.float32),
            "wi": nrm(lk[2], (hidden, ffn), jnp.bfloat16),
            "bi": jnp.zeros((1, ffn), jnp.float32),
            "wd": nrm(lk[3], (ffn, hidden), jnp.bfloat16),
            "bd": jnp.zeros((1, hidden), jnp.float32),
            "ln2_g": jnp.ones((1, hidden), jnp.float32),
            "ln2_b": jnp.zeros((1, hidden), jnp.float32),
        })
    return params


# ------------------------------------ main -------------------------------------

if __name__ == "__main__":
    # Small, lane-dense BERT-like config (real bert-base: H=768, 12 layers/heads).
    # Lane dims (H=256, 3H=768, FFN=1024) are multiples of 128 -> dense stores.
    B, S = 2, 64
    HIDDEN, N_HEADS, N_LAYERS, FFN = 256, 2, 2, 1024
    VOCAB, MAX_POS = 256, 128

    key = jax.random.PRNGKey(0)
    k_params, k_ids = jax.random.split(key)

    params = init_params(k_params, VOCAB, MAX_POS, HIDDEN, FFN, N_LAYERS)
    # input: token ids, shape (batch, seq)
    x = jax.random.randint(k_ids, (B, S), 0, VOCAB, dtype=jnp.int32)

    # row_tile=64 -> row-tiled grids of 2 steps (exercises the pipelined path).
    out = caption_encoder(x, params, N_HEADS, row_tile=64)
    out = jax.block_until_ready(out)
    assert out.shape == (B, HIDDEN) and out.dtype == jnp.float32
    assert bool(jnp.all(jnp.isfinite(out)))

    print("KERNEL_OK")
</pallas_src>

<mosaic_0001>
module attributes {stable_mosaic.version = 11 : i64} {
  func.func @_embed_ln_kernel(%arg0: i32, %arg1: memref<64x256xf32, #tpu.memory_space<vmem>>, %arg2: memref<64x256xf32, #tpu.memory_space<vmem>>, %arg3: memref<1x256xf32, #tpu.memory_space<vmem>>, %arg4: memref<1x256xf32, #tpu.memory_space<vmem>>, %arg5: memref<1x256xf32, #tpu.memory_space<vmem>>, %arg6: memref<64x256xf32, #tpu.memory_space<vmem>>) attributes {dimension_semantics = [#tpu.dimension_semantics<parallel>], iteration_bounds = array<i64: 2>, scalar_prefetch = 0 : i64, scratch_operands = 0 : i64, tpu.core_type = #tpu.core_type<tc>, window_params = [{transform_indices = @transform_0, window_bounds = array<i64: 64, 256>}, {transform_indices = @transform_1, window_bounds = array<i64: 64, 256>}, {pipeline_mode = #tpu.pipeline_mode<synchronous>, transform_indices = @transform_2, window_bounds = array<i64: 1, 256>}, {pipeline_mode = #tpu.pipeline_mode<synchronous>, transform_indices = @transform_3, window_bounds = array<i64: 1, 256>}, {pipeline_mode = #tpu.pipeline_mode<synchronous>, transform_indices = @transform_4, window_bounds = array<i64: 1, 256>}, {transform_indices = @transform_5, window_bounds = array<i64: 64, 256>}]} {
    %c0 = arith.constant 0 : index
    %c0_0 = arith.constant 0 : index
    %0 = vector.load %arg1[%c0, %c0_0] : memref<64x256xf32, #tpu.memory_space<vmem>>, vector<64x256xf32>
    %c0_1 = arith.constant 0 : index
    %c0_2 = arith.constant 0 : index
    %1 = vector.load %arg2[%c0_1, %c0_2] : memref<64x256xf32, #tpu.memory_space<vmem>>, vector<64x256xf32>
    %2 = arith.addf %0, %1 : vector<64x256xf32>
    %c0_3 = arith.constant 0 : index
    %c0_4 = arith.constant 0 : index
    %3 = vector.load %arg3[%c0_3, %c0_4] : memref<1x256xf32, #tpu.memory_space<vmem>>, vector<1x256xf32>
    %4 = vector.broadcast %3 : vector<1x256xf32> to vector<64x256xf32>
    %5 = arith.addf %2, %4 : vector<64x256xf32>
    %c0_5 = arith.constant 0 : index
    %c0_6 = arith.constant 0 : index
    %6 = vector.load %arg4[%c0_5, %c0_6] : memref<1x256xf32, #tpu.memory_space<vmem>>, vector<1x256xf32>
    %c0_7 = arith.constant 0 : index
    %c0_8 = arith.constant 0 : index
    %7 = vector.load %arg5[%c0_7, %c0_8] : memref<1x256xf32, #tpu.memory_space<vmem>>, vector<1x256xf32>
    %cst = arith.constant dense<0.000000e+00> : vector<64xf32>
    %8 = vector.multi_reduction <add>, %5, %cst [1] : vector<64x256xf32> to vector<64xf32>
    %9 = vector.shape_cast %8 : vector<64xf32> to vector<64x1xf32>
    %cst_9 = arith.constant 2.560000e+02 : f32
    %10 = vector.broadcast %cst_9 : f32 to vector<64x1xf32>
    %11 = arith.divf %9, %10 : vector<64x1xf32>
    %12 = vector.broadcast %11 : vector<64x1xf32> to vector<64x256xf32>
    %13 = arith.subf %5, %12 : vector<64x256xf32>
    %14 = arith.mulf %13, %13 : vector<64x256xf32>
    %cst_10 = arith.constant dense<0.000000e+00> : vector<64xf32>
    %15 = vector.multi_reduction <add>, %14, %cst_10 [1] : vector<64x256xf32> to vector<64xf32>
    %16 = vector.shape_cast %15 : vector<64xf32> to vector<64x1xf32>
    %cst_11 = arith.constant 2.560000e+02 : f32
    %17 = vector.broadcast %cst_11 : f32 to vector<64x1xf32>
    %18 = arith.divf %16, %17 : vector<64x1xf32>
    %19 = vector.broadcast %11 : vector<64x1xf32> to vector<64x256xf32>
    %20 = arith.subf %5, %19 : vector<64x256xf32>
    %cst_12 = arith.constant 9.99999996E-13 : f32
    %21 = vector.broadcast %cst_12 : f32 to vector<64x1xf32>
    %22 = arith.addf %18, %21 : vector<64x1xf32>
    %23 = math.rsqrt %22 : vector<64x1xf32>
    %24 = vector.broadcast %23 : vector<64x1xf32> to vector<64x256xf32>
    %25 = arith.mulf %20, %24 : vector<64x256xf32>
    %26 = vector.broadcast %6 : vector<1x256xf32> to vector<64x256xf32>
    %27 = arith.mulf %25, %26 : vector<64x256xf32>
    %28 = vector.broadcast %7 : vector<1x256xf32> to vector<64x256xf32>
    %29 = arith.addf %27, %28 : vector<64x256xf32>
    %c0_13 = arith.constant 0 : index
    %c0_14 = arith.constant 0 : index
    %30 = vector.load %arg6[%c0_13, %c0_14] : memref<64x256xf32, #tpu.memory_space<vmem>>, vector<64x256xf32>
    tpu.vector_store %arg6[%c0_13, %c0_14], %29 {strides = array<i32>} : memref<64x256xf32, #tpu.memory_space<vmem>>, vector<64x256xf32>,
    return
  }
  func.func @transform_0(%arg0: i32) -> (i32, i32) {
    %c0_i32 = arith.constant 0 : i32
    %c0_i32_0 = arith.constant 0 : i32
    return %arg0, %c0_i32 : i32, i32
  }
  func.func @transform_1(%arg0: i32) -> (i32, i32) {
    %c0_i32 = arith.constant 0 : i32
    %c0_i32_0 = arith.constant 0 : i32
    return %arg0, %c0_i32 : i32, i32
  }
  func.func @transform_2(%arg0: i32) -> (i32, i32) {
    %c0_i32 = arith.constant 0 : i32
    %c0_i32_0 = arith.constant 0 : i32
    %c0_i32_1 = arith.constant 0 : i32
    return %c0_i32, %c0_i32_0 : i32, i32
  }
  func.func @transform_3(%arg0: i32) -> (i32, i32) {
    %c0_i32 = arith.constant 0 : i32
    %c0_i32_0 = arith.constant 0 : i32
    %c0_i32_1 = arith.constant 0 : i32
    return %c0_i32, %c0_i32_0 : i32, i32
  }
  func.func @transform_4(%arg0: i32) -> (i32, i32) {
    %c0_i32 = arith.constant 0 : i32
    %c0_i32_0 = arith.constant 0 : i32
    %c0_i32_1 = arith.constant 0 : i32
    return %c0_i32, %c0_i32_0 : i32, i32
  }
  func.func @transform_5(%arg0: i32) -> (i32, i32) {
    %c0_i32 = arith.constant 0 : i32
    %c0_i32_0 = arith.constant 0 : i32
    return %arg0, %c0_i32 : i32, i32
  }
}

</mosaic_0001>

<llo_original>
// kernel: tpu_custom_call.1
$region0: #{tpu_custom_call.1}
  #allocation0 [shape = 'u32[]', space=smem, size = 0x4, offset = 0x4, fixed_abs, tag = 'smem constant byte address 0x4 - core index']
  #allocation1 [shape = 'u32[144,128]{1,0:T(1,128)}', space=vmem, size = 0x12000, scoped, tag = 'internal scratch']
  %s0 = inlined_call_operand.hbm [shape: f32[128,256], index: 0, kind: input, shape index: {}]
  %s1 = inlined_call_operand.hbm [shape: f32[128,256], index: 1, kind: input, shape index: {}]
  %s2 = inlined_call_operand.vmem [shape: f32[1,256], index: 2, kind: input, shape index: {}]
  %s3 = inlined_call_operand.vmem [shape: f32[1,256], index: 3, kind: input, shape index: {}]
  %s4 = inlined_call_operand.vmem [shape: f32[1,256], index: 4, kind: input, shape index: {}]
  %s5 = inlined_call_operand.hbm [shape: f32[128,256], index: 5, kind: output, shape index: {}]
  %s6 = sld [smem:[#allocation0]]
  $region61: #{tpu_custom_call.1} parent=0
    _
  %s8 = ssub.s32 1, %s6
  %s9 = scalar_select 0, %s8, %s6
  $region1: #{tpu_custom_call.1} parent=0
    #allocation2 [shape = 'u8[131072]{0}', space=vmem, size = 0x20000, scoped, tag = 'input window, operand 0']
    #allocation3 [shape = 's32[2]{0}', space=sflag, size = 0x8, scoped, tag = 'scoped memory for tpu_custom_call.1']
    #allocation4 [shape = 's32[2]{0}', space=sflag, size = 0x8, scoped, tag = 'scoped memory for tpu_custom_call.1']
    #allocation5 [shape = 'u8[131072]{0}', space=vmem, size = 0x20000, scoped, tag = 'input window, operand 1']
    #allocation6 [shape = 's32[2]{0}', space=sflag, size = 0x8, scoped, tag = 'scoped memory for tpu_custom_call.1']
    #allocation7 [shape = 'u8[131072]{0}', space=vmem, size = 0x20000, scoped, tag = 'output window, operand 0']
    %10 = vsyncpa [#allocation3], 0
    %s11 = scalar_lea.sflag [#allocation3], 1
    %12 = vsyncpa %s11, 0
    %13 = vsyncpa [#allocation6], 0
    %s14 = scalar_lea.sflag [#allocation6], 1
    %15 = vsyncpa %s14, 0
    %16 = vsyncpa [#allocation4], 0
    %s17 = scalar_lea.sflag [#allocation4], 1
    %18 = vsyncpa %s17, 0
    loop: start=0, step=1, limit=4
    $region2: #{tpu_custom_call.1} parent=1 // loop_pre_header
      _
    $region3: #{tpu_custom_call.1} parent=1 // loop_header
      %s20 = sphi 0, %s24
      %p21 = scmp.ge.s32.totalorder %s20, 4
      %s30 = sphi 0, %s32
      %s33 = sphi 0, %s30
      %s34 = sphi 0, %s33
      %s50 = sphi 0, %s34
      %s56 = sphi 0, %s58
      %s59 = sphi 0, %s56
      %s60 = sphi 0, %s59
      %s76 = sphi 0, %s60
      %s80 = sphi 0, %s80
      %s82 = sphi 0, %s80
      %s83 = sphi 0, %s82
      %s97 = sphi 0, %s83
      %s101 = sphi 0, %s101
      %s103 = sphi 0, %s101
      %s104 = sphi 0, %s103
      %s118 = sphi 0, %s104
      %s122 = sphi 0, %s122
      %s124 = sphi 0, %s122
      %s125 = sphi 0, %s124
      %s139 = sphi 0, %s125
      %s145 = sphi 0, %s147
      %s148 = sphi 0, %s145
      %s149 = sphi 0, %s148
      %s165 = sphi 0, %s149
    $region4: #{tpu_custom_call.1} parent=1 // loop_header_branch
      %23 = sbr.rel (%p21) target = $region8
    $region5: #{tpu_custom_call.1} parent=1 // loop_body
      %s25 = ssub.s32 %s20, 1
      %s26 = ssub.s32 %s20, 2
      %s27 = sadd.s32 %s20, 1
      %s28 = ssub.s32 %s20, %s27
      %p29 = scmp.eq.s32.totalorder %s28, 0
      %s31 = sadd.s32 %s30, 1
      %s32 = scalar_select %p29, %s30, %s31
      %p35 = pneg %p29
      %p36 = scmp.eq.s32.totalorder %s20, 1
      %p37 = por %p35, %p36
      %p38 = scmp.ne.s32.totalorder %s30, %s33
      %p39 = scmp.eq.s32.totalorder %s20, 0
      %p40 = por %p38, %p39
      %p41 = scmp.ne.s32.totalorder %s30, %s33
      %p42 = scmp.eq.s32.totalorder %s25, 1
      %p43 = por %p41, %p42
      %p44 = scmp.ne.s32.totalorder %s33, %s34
      %p45 = scmp.eq.s32.totalorder %s25, 0
      %p46 = por %p44, %p45
      %p47 = scmp.ne.s32.totalorder %s33, %s34
      %p48 = scmp.eq.s32.totalorder %s26, 1
      %p49 = por %p47, %p48
      %p51 = scmp.ne.s32.totalorder %s34, %s50
      %p52 = scmp.eq.s32.totalorder %s26, 0
      %p53 = por %p51, %p52
      %s54 = ssub.s32 %s20, %s27
      %p55 = scmp.eq.s32.totalorder %s54, 0
      %s57 = sadd.s32 %s56, 1
      %s58 = scalar_select %p55, %s56, %s57
      %p61 = pneg %p55
      %p62 = scmp.eq.s32.totalorder %s20, 1
      %p63 = por %p61, %p62
      %p64 = scmp.ne.s32.totalorder %s56, %s59
      %p65 = scmp.eq.s32.totalorder %s20, 0
      %p66 = por %p64, %p65
      %p67 = scmp.ne.s32.totalorder %s56, %s59
      %p68 = scmp.eq.s32.totalorder %s25, 1
      %p69 = por %p67, %p68
      %p70 = scmp.ne.s32.totalorder %s59, %s60
      %p71 = scmp.eq.s32.totalorder %s25, 0
      %p72 = por %p70, %p71
      %p73 = scmp.ne.s32.totalorder %s59, %s60
      %p74 = scmp.eq.s32.totalorder %s26, 1
      %p75 = por %p73, %p74
      %p77 = scmp.ne.s32.totalorder %s60, %s76
      %p78 = scmp.eq.s32.totalorder %s26, 0
      %p79 = por %p77, %p78
      %s81 = sadd.s32 %s80, 1
      %p84 = scmp.eq.s32.totalorder %s20, 1
      %p85 = scmp.ne.s32.totalorder %s80, %s82
      %p86 = scmp.eq.s32.totalorder %s20, 0
      %p87 = por %p85, %p86
      %p88 = scmp.ne.s32.totalorder %s80, %s82
      %p89 = scmp.eq.s32.totalorder %s25, 1
      %p90 = por %p88, %p89
      %p91 = scmp.ne.s32.totalorder %s82, %s83
      %p92 = scmp.eq.s32.totalorder %s25, 0
      %p93 = por %p91, %p92
      %p94 = scmp.ne.s32.totalorder %s82, %s83
      %p95 = scmp.eq.s32.totalorder %s26, 1
      %p96 = por %p94, %p95
      %p98 = scmp.ne.s32.totalorder %s83, %s97
      %p99 = scmp.eq.s32.totalorder %s26, 0
      %p100 = por %p98, %p99
      %s102 = sadd.s32 %s101, 1
      %p105 = scmp.eq.s32.totalorder %s20, 1
      %p106 = scmp.ne.s32.totalorder %s101, %s103
      %p107 = scmp.eq.s32.totalorder %s20, 0
      %p108 = por %p106, %p107
      %p109 = scmp.ne.s32.totalorder %s101, %s103
      %p110 = scmp.eq.s32.totalorder %s25, 1
      %p111 = por %p109, %p110
      %p112 = scmp.ne.s32.totalorder %s103, %s104
      %p113 = scmp.eq.s32.totalorder %s25, 0
      %p114 = por %p112, %p113
      %p115 = scmp.ne.s32.totalorder %s103, %s104
      %p116 = scmp.eq.s32.totalorder %s26, 1
      %p117 = por %p115, %p116
      %p119 = scmp.ne.s32.totalorder %s104, %s118
      %p120 = scmp.eq.s32.totalorder %s26, 0
      %p121 = por %p119, %p120
      %s123 = sadd.s32 %s122, 1
      %p126 = scmp.eq.s32.totalorder %s20, 1
      %p127 = scmp.ne.s32.totalorder %s122, %s124
      %p128 = scmp.eq.s32.totalorder %s20, 0
      %p129 = por %p127, %p128
      %p130 = scmp.ne.s32.totalorder %s122, %s124
      %p131 = scmp.eq.s32.totalorder %s25, 1
      %p132 = por %p130, %p131
      %p133 = scmp.ne.s32.totalorder %s124, %s125
      %p134 = scmp.eq.s32.totalorder %s25, 0
      %p135 = por %p133, %p134
      %p136 = scmp.ne.s32.totalorder %s124, %s125
      %p137 = scmp.eq.s32.totalorder %s26, 1
      %p138 = por %p136, %p137
      %p140 = scmp.ne.s32.totalorder %s125, %s139
      %p141 = scmp.eq.s32.totalorder %s26, 0
      %p142 = por %p140, %p141
      %s143 = ssub.s32 %s20, %s27
      %p144 = scmp.eq.s32.totalorder %s143, 0
      %s146 = sadd.s32 %s145, 1
      %s147 = scalar_select %p144, %s145, %s146
      %p150 = pneg %p144
      %p151 = scmp.eq.s32.totalorder %s20, 1
      %p152 = por %p150, %p151
      %p153 = scmp.ne.s32.totalorder %s145, %s148
      %p154 = scmp.eq.s32.totalorder %s20, 0
      %p155 = por %p153, %p154
      %p156 = scmp.ne.s32.totalorder %s145, %s148
      %p157 = scmp.eq.s32.totalorder %s25, 1
      %p158 = por %p156, %p157
      %p159 = scmp.ne.s32.totalorder %s148, %s149
      %p160 = scmp.eq.s32.totalorder %s25, 0
      %p161 = por %p159, %p160
      %p162 = scmp.ne.s32.totalorder %s148, %s149
      %p163 = scmp.eq.s32.totalorder %s26, 1
      %p164 = por %p162, %p163
      %p166 = scmp.ne.s32.totalorder %s149, %s165
      %p167 = scmp.eq.s32.totalorder %s26, 0
      %p168 = por %p166, %p167
      %p169 = scmp.le.s32.totalorder 1, %s20
      %p170 = scmp.lt.s32.totalorder %s20, 3
      %p171 = pnand %p169, %p170
      %p172 = pneg %p171
      // Predicated region
      $region9: #{tpu_custom_call.1} parent=5 // pred_check
        _
      $region10: #{tpu_custom_call.1} parent=5 // pred_check_branch
        %174 = sbr.rel (%p171) target = $region12
      $region11: #{tpu_custom_call.1} parent=5 // pred_region
        %s175 = ssub.s32 %s20, 1
        // Predicated region
        $region13: #{tpu_custom_call.1} parent=11 // pred_check
          %p176 = pneg %p93
        $region14: #{tpu_custom_call.1} parent=11 // pred_check_branch
          %178 = sbr.rel (%p176) target = $region16
        $region15: #{tpu_custom_call.1} parent=11 // pred_region
          _
        $region16: #{tpu_custom_call.1} parent=11 // pred_fallthru
          _
        // Predicated region
        $region17: #{tpu_custom_call.1} parent=11 // pred_check
          %p179 = pneg %p114
        $region18: #{tpu_custom_call.1} parent=11 // pred_check_branch
          %181 = sbr.rel (%p179) target = $region20
        $region19: #{tpu_custom_call.1} parent=11 // pred_region
          _
        $region20: #{tpu_custom_call.1} parent=11 // pred_fallthru
          _
        // Predicated region
        $region21: #{tpu_custom_call.1} parent=11 // pred_check
          %p182 = pneg %p135
        $region22: #{tpu_custom_call.1} parent=11 // pred_check_branch
          %184 = sbr.rel (%p182) target = $region24
        $region23: #{tpu_custom_call.1} parent=11 // pred_region
          _
        $region24: #{tpu_custom_call.1} parent=11 // pred_fallthru
          _
      $region12: #{tpu_custom_call.1} parent=5 // pred_fallthru
        _
      %p185 = scmp.lt.s32.totalorder %s20, 2
      // Predicated region
      $region25: #{tpu_custom_call.1} parent=5 // pred_check
        %p186 = pneg %p185
      $region26: #{tpu_custom_call.1} parent=5 // pred_check_branch
        %188 = sbr.rel (%p186) target = $region28
      $region27: #{tpu_custom_call.1} parent=5 // pred_region
        // Predicated region
        $region29: #{tpu_custom_call.1} parent=27 // pred_check
          %p189 = pneg %p40
        $region30: #{tpu_custom_call.1} parent=27 // pred_check_branch
          %191 = sbr.rel (%p189) target = $region32
        $region31: #{tpu_custom_call.1} parent=27 // pred_region
          %s192 = sand.u32 %s30, 1
          %s193 = scalar_lea.sflag [#allocation3], %s192
          %s194 = sand.u32 %s30, 1
          %s195 = smul.addr %s194, 128
          %s196 = scalar_lea.vmem [#allocation2], %s195
          %s197 = smul.u32 8, %s20
          %s199 = ssub.s32 2048, 2048
          %200 = vsyncadd %s193, %s199
          %s201 = smul.addr %s197, 2
          %s202 = smul.addr %s201, 128
          %s203 = scalar_lea.hbm %s0, %s202
          %s204 = sshll.u32 %s196, 4
          %s205 = int_to_ptr.vmem [resolvable:$true] %s204
          %210 = dma.hbm_to_vmem [thread:$0]  %s203, 2048, %s205, %s193, 256, 256, 16
        $region32: #{tpu_custom_call.1} parent=27 // pred_fallthru
          _
        // Predicated region
        $region33: #{tpu_custom_call.1} parent=27 // pred_check
          %p211 = pneg %p66
        $region34: #{tpu_custom_call.1} parent=27 // pred_check_branch
          %213 = sbr.rel (%p211) target = $region36
        $region35: #{tpu_custom_call.1} parent=27 // pred_region
          %s214 = sand.u32 %s56, 1
          %s215 = scalar_lea.sflag [#allocation6], %s214
          %s216 = sand.u32 %s56, 1
          %s217 = smul.addr %s216, 128
          %s218 = scalar_lea.vmem [#allocation5], %s217
          %s219 = smul.u32 8, %s20
          %s221 = ssub.s32 2048, 2048
          %222 = vsyncadd %s215, %s221
          %s223 = smul.addr %s219, 2
          %s224 = smul.addr %s223, 128
          %s225 = scalar_lea.hbm %s1, %s224
          %s226 = sshll.u32 %s218, 4
          %s227 = int_to_ptr.vmem [resolvable:$true] %s226
          %232 = dma.hbm_to_vmem [thread:$0]  %s225, 2048, %s227, %s215, 256, 256, 16
        $region36: #{tpu_custom_call.1} parent=27 // pred_fallthru
          _
      $region28: #{tpu_custom_call.1} parent=5 // pred_fallthru
        _
      %p233 = scmp.le.s32.totalorder 1, %s20
      %p234 = scmp.lt.s32.totalorder %s20, 3
      %p235 = pnand %p233, %p234
      %p236 = pneg %p235
      // Predicated region
      $region37: #{tpu_custom_call.1} parent=5 // pred_check
        _
      $region38: #{tpu_custom_call.1} parent=5 // pred_check_branch
        %238 = sbr.rel (%p235) target = $region40
      $region39: #{tpu_custom_call.1} parent=5 // pred_region
        %s239 = ssub.s32 %s20, 1
        %s240 = sand.u32 %s33, 1
        %s241 = scalar_lea.sflag [#allocation3], %s240
        %s242 = sand.u32 %s33, 1
        %s243 = smul.addr %s242, 128
        %s244 = scalar_lea.vmem [#allocation2], %s243
        // Predicated region
        $region41: #{tpu_custom_call.1} parent=39 // pred_check
          %p245 = pneg %p46
        $region42: #{tpu_custom_call.1} parent=39 // pred_check_branch
          %247 = sbr.rel (%p245) target = $region44
        $region43: #{tpu_custom_call.1} parent=39 // pred_region
          %248 = dma.done %s241, 2048
        $region44: #{tpu_custom_call.1} parent=39 // pred_fallthru
          _
        %s249 = sand.u32 %s59, 1
        %s250 = scalar_lea.sflag [#allocation6], %s249
        %s251 = sand.u32 %s59, 1
        %s252 = smul.addr %s251, 128
        %s253 = scalar_lea.vmem [#allocation5], %s252
        // Predicated region
        $region45: #{tpu_custom_call.1} parent=39 // pred_check
          %p254 = pneg %p72
        $region46: #{tpu_custom_call.1} parent=39 // pred_check_branch
          %256 = sbr.rel (%p254) target = $region48
        $region47: #{tpu_custom_call.1} parent=39 // pred_region
          %257 = dma.done %s250, 2048
        $region48: #{tpu_custom_call.1} parent=39 // pred_fallthru
          _
        %s258 = sand.u32 %s33, 1
        %s259 = scalar_lea.sflag [#allocation3], %s258
        %s260 = sand.u32 %s33, 1
        %s261 = smul.addr %s260, 128
        %s262 = scalar_lea.vmem [#allocation2], %s261
        %p263 = pneg %p46
        %p264 = pneg %p43
        %s265 = sand.u32 %s59, 1
        %s266 = scalar_lea.sflag [#allocation6], %s265
        %s267 = sand.u32 %s59, 1
        %s268 = smul.addr %s267, 128
        %s269 = scalar_lea.vmem [#allocation5], %s268
        %p270 = pneg %p72
        %p271 = pneg %p69
        %p272 = pneg %p93
        %p273 = pneg %p90
        %p274 = pneg %p114
        %p275 = pneg %p111
        %p276 = pneg %p135
        %p277 = pneg %p132
        %p278 = pneg %p161
        %p279 = pneg %p158
        %s280 = sand.u32 %s148, 1
        %s281 = scalar_lea.sflag [#allocation4], %s280
        %s282 = sand.u32 %s148, 1
        %s283 = smul.addr %s282, 128
        %s284 = scalar_lea.vmem [#allocation7], %s283
        %s285 = smul.u32 8, %s25
        %s286 = smul.u32 8, %s25
        %s287 = smul.u32 8, %s25
        %v288 = vld [vmem:[%s244] sm:$0xff]
        %v289 = vld [vmem:[%s244 + $0x8] sm:$0xff]
        %v290 = vld [vmem:[%s244 + $0x10] sm:$0xff]
        %v291 = vld [vmem:[%s244 + $0x18] sm:$0xff]
        %v292 = vld [vmem:[%s244 + $0x20] sm:$0xff]
        %v293 = vld [vmem:[%s244 + $0x28] sm:$0xff]
        %v294 = vld [vmem:[%s244 + $0x30] sm:$0xff]
        %v295 = vld [vmem:[%s244 + $0x38] sm:$0xff]
        %v296 = vld [vmem:[%s244 + $0x40] sm:$0xff]
        %v297 = vld [vmem:[%s244 + $0x48] sm:$0xff]
        %v298 = vld [vmem:[%s244 + $0x50] sm:$0xff]
        %v299 = vld [vmem:[%s244 + $0x58] sm:$0xff]
        %v300 = vld [vmem:[%s244 + $0x60] sm:$0xff]
        %v301 = vld [vmem:[%s244 + $0x68] sm:$0xff]
        %v302 = vld [vmem:[%s244 + $0x70] sm:$0xff]
        %v303 = vld [vmem:[%s244 + $0x78] sm:$0xff]
        %v304 = vld [vmem:[%s253] sm:$0xff]
        %v305 = vld [vmem:[%s253 + $0x8] sm:$0xff]
        %v306 = vld [vmem:[%s253 + $0x10] sm:$0xff]
        %v307 = vld [vmem:[%s253 + $0x18] sm:$0xff]
        %v308 = vld [vmem:[%s253 + $0x20] sm:$0xff]
        %v309 = vld [vmem:[%s253 + $0x28] sm:$0xff]
        %v310 = vld [vmem:[%s253 + $0x30] sm:$0xff]
        %v311 = vld [vmem:[%s253 + $0x38] sm:$0xff]
        %v312 = vld [vmem:[%s253 + $0x40] sm:$0xff]
        %v313 = vld [vmem:[%s253 + $0x48] sm:$0xff]
        %v314 = vld [vmem:[%s253 + $0x50] sm:$0xff]
        %v315 = vld [vmem:[%s253 + $0x58] sm:$0xff]
        %v316 = vld [vmem:[%s253 + $0x60] sm:$0xff]
        %v317 = vld [vmem:[%s253 + $0x68] sm:$0xff]
        %v318 = vld [vmem:[%s253 + $0x70] sm:$0xff]
        %v319 = vld [vmem:[%s253 + $0x78] sm:$0xff]
        %v320 = vadd.f32 %v288, %v304
        %v321 = vadd.f32 %v289, %v305
        %v322 = vadd.f32 %v290, %v306
        %v323 = vadd.f32 %v291, %v307
        %v324 = vadd.f32 %v292, %v308
        %v325 = vadd.f32 %v293, %v309
        %v326 = vadd.f32 %v294, %v310
        %v327 = vadd.f32 %v295, %v311
        %v328 = vadd.f32 %v296, %v312
        %v329 = vadd.f32 %v297, %v313
        %v330 = vadd.f32 %v298, %v314
        %v331 = vadd.f32 %v299, %v315
        %v332 = vadd.f32 %v300, %v316
        %v333 = vadd.f32 %v301, %v317
        %v334 = vadd.f32 %v302, %v318
        %v335 = vadd.f32 %v303, %v319
        %v336 = vld [vmem:[%s2] sm:$0x3]
        %v338 = vlaneseq
        %v339 = vshrl.u32 %v338, 7
        %v340 = vsub.s32 0, %v339
        %v341 = vrot.slane %v336, %v340
        %v342 = vlaneseq
        %v343 = vshrl.u32 %v342, 7
        %v344 = vsub.s32 1, %v343
        %v345 = vrot.slane %v336, %v344
        %v348 = vadd.f32 %v320, %v341
        %v349 = vadd.f32 %v321, %v345
        %v350 = vadd.f32 %v322, %v341
        %v351 = vadd.f32 %v323, %v345
        %v352 = vadd.f32 %v324, %v341
        %v353 = vadd.f32 %v325, %v345
        %v354 = vadd.f32 %v326, %v341
        %v355 = vadd.f32 %v327, %v345
        %v356 = vadd.f32 %v328, %v341
        %v357 = vadd.f32 %v329, %v345
        %v358 = vadd.f32 %v330, %v341
        %v359 = vadd.f32 %v331, %v345
        %v360 = vadd.f32 %v332, %v341
        %v361 = vadd.f32 %v333, %v345
        %v362 = vadd.f32 %v334, %v341
        %v363 = vadd.f32 %v335, %v345
        %v364 = vld [vmem:[%s3] sm:$0x3]
        %v365 = vld [vmem:[%s4] sm:$0x3]
        %v366 = vadd.f32 %v348, %v349
        %367 = vadd.xlane.f32.xlu0 %v366
        %v368 = vpop.xlane.xlu0 %367
        %v369 = vadd.f32 %v350, %v351
        %370 = vadd.xlane.f32.xlu0 %v369
        %v371 = vpop.xlane.xlu0 %370
        %v372 = vadd.f32 %v352, %v353
        %373 = vadd.xlane.f32.xlu0 %v372
        %v374 = vpop.xlane.xlu0 %373
        %v375 = vadd.f32 %v354, %v355
        %376 = vadd.xlane.f32.xlu0 %v375
        %v377 = vpop.xlane.xlu0 %376
        %v378 = vadd.f32 %v356, %v357
        %379 = vadd.xlane.f32.xlu0 %v378
        %v380 = vpop.xlane.xlu0 %379
        %v381 = vadd.f32 %v358, %v359
        %382 = vadd.xlane.f32.xlu0 %v381
        %v383 = vpop.xlane.xlu0 %382
        %v384 = vadd.f32 %v360, %v361
        %385 = vadd.xlane.f32.xlu0 %v384
        %v386 = vpop.xlane.xlu0 %385
        %v387 = vadd.f32 %v362, %v363
        %388 = vadd.xlane.f32.xlu0 %v387
        %v389 = vpop.xlane.xlu0 %388
        %v390 = vrcp.pop 256.0
        %v391 = vmul.f32 %v368, %v390
        %v392 = vmul.f32 %v371, %v390
        %v393 = vmul.f32 %v374, %v390
        %v394 = vmul.f32 %v377, %v390
        %v395 = vmul.f32 %v380, %v390
        %v396 = vmul.f32 %v383, %v390
        %v397 = vmul.f32 %v386, %v390
        %v398 = vmul.f32 %v389, %v390
        %v399 = vsub.f32 %v348, %v391
        %v400 = vsub.f32 %v349, %v391
        %v401 = vsub.f32 %v350, %v392
        %v402 = vsub.f32 %v351, %v392
        %v403 = vsub.f32 %v352, %v393
        %v404 = vsub.f32 %v353, %v393
        %v405 = vsub.f32 %v354, %v394
        %v406 = vsub.f32 %v355, %v394
        %v407 = vsub.f32 %v356, %v395
        %v408 = vsub.f32 %v357, %v395
        %v409 = vsub.f32 %v358, %v396
        %v410 = vsub.f32 %v359, %v396
        %v411 = vsub.f32 %v360, %v397
        %v412 = vsub.f32 %v361, %v397
        %v413 = vsub.f32 %v362, %v398
        %v414 = vsub.f32 %v363, %v398
        %v415 = vmul.f32 %v399, %v399
        %v416 = vmul.f32 %v400, %v400
        %v417 = vmul.f32 %v401, %v401
        %v418 = vmul.f32 %v402, %v402
        %v419 = vmul.f32 %v403, %v403
        %v420 = vmul.f32 %v404, %v404
        %v421 = vmul.f32 %v405, %v405
        %v422 = vmul.f32 %v406, %v406
        %v423 = vmul.f32 %v407, %v407
        %v424 = vmul.f32 %v408, %v408
        %v425 = vmul.f32 %v409, %v409
        %v426 = vmul.f32 %v410, %v410
        %v427 = vmul.f32 %v411, %v411
        %v428 = vmul.f32 %v412, %v412
        %v429 = vmul.f32 %v413, %v413
        %v430 = vmul.f32 %v414, %v414
        %v431 = vadd.f32 %v415, %v416
        %432 = vadd.xlane.f32.xlu0 %v431
        %v433 = vpop.xlane.xlu0 %432
        %v434 = vadd.f32 %v417, %v418
        %435 = vadd.xlane.f32.xlu0 %v434
        %v436 = vpop.xlane.xlu0 %435
        %v437 = vadd.f32 %v419, %v420
        %438 = vadd.xlane.f32.xlu0 %v437
        %v439 = vpop.xlane.xlu0 %438
        %v440 = vadd.f32 %v421, %v422
        %441 = vadd.xlane.f32.xlu0 %v440
        %v442 = vpop.xlane.xlu0 %441
        %v443 = vadd.f32 %v423, %v424
        %444 = vadd.xlane.f32.xlu0 %v443
        %v445 = vpop.xlane.xlu0 %444
        %v446 = vadd.f32 %v425, %v426
        %447 = vadd.xlane.f32.xlu0 %v446
        %v448 = vpop.xlane.xlu0 %447
        %v449 = vadd.f32 %v427, %v428
        %450 = vadd.xlane.f32.xlu0 %v449
        %v451 = vpop.xlane.xlu0 %450
        %v452 = vadd.f32 %v429, %v430
        %453 = vadd.xlane.f32.xlu0 %v452
        %v454 = vpop.xlane.xlu0 %453
        %v455 = vmul.f32 %v433, %v390
        %v456 = vmul.f32 %v436, %v390
        %v457 = vmul.f32 %v439, %v390
        %v458 = vmul.f32 %v442, %v390
        %v459 = vmul.f32 %v445, %v390
        %v460 = vmul.f32 %v448, %v390
        %v461 = vmul.f32 %v451, %v390
        %v462 = vmul.f32 %v454, %v390
        %v463 = vadd.f32 %v455, 1e-12
        %v464 = vadd.f32 %v456, 1e-12
        %v465 = vadd.f32 %v457, 1e-12
        %v466 = vadd.f32 %v458, 1e-12
        %v467 = vadd.f32 %v459, 1e-12
        %v468 = vadd.f32 %v460, 1e-12
        %v469 = vadd.f32 %v461, 1e-12
        %v470 = vadd.f32 %v462, 1e-12
        %v471 = vrsqrt.pop %v463
        %v472 = vrsqrt.pop %v464
        %v473 = vrsqrt.pop %v465
        %v474 = vrsqrt.pop %v466
        %v475 = vrsqrt.pop %v467
        %v476 = vrsqrt.pop %v468
        %v477 = vrsqrt.pop %v469
        %v478 = vrsqrt.pop %v470
        %v479 = vmul.f32 %v399, %v471
        %v480 = vmul.f32 %v400, %v471
        %v481 = vmul.f32 %v401, %v472
        %v482 = vmul.f32 %v402, %v472
        %v483 = vmul.f32 %v403, %v473
        %v484 = vmul.f32 %v404, %v473
        %v485 = vmul.f32 %v405, %v474
        %v486 = vmul.f32 %v406, %v474
        %v487 = vmul.f32 %v407, %v475
        %v488 = vmul.f32 %v408, %v475
        %v489 = vmul.f32 %v409, %v476
        %v490 = vmul.f32 %v410, %v476
        %v491 = vmul.f32 %v411, %v477
        %v492 = vmul.f32 %v412, %v477
        %v493 = vmul.f32 %v413, %v478
        %v494 = vmul.f32 %v414, %v478
        %v496 = vlaneseq
        %v497 = vshrl.u32 %v496, 7
        %v498 = vsub.s32 0, %v497
        %v499 = vrot.slane %v364, %v498
        %v500 = vlaneseq
        %v501 = vshrl.u32 %v500, 7
        %v502 = vsub.s32 1, %v501
        %v503 = vrot.slane %v364, %v502
        %v506 = vmul.f32 %v479, %v499
        %v507 = vmul.f32 %v480, %v503
        %v508 = vmul.f32 %v481, %v499
        %v509 = vmul.f32 %v482, %v503
        %v510 = vmul.f32 %v483, %v499
        %v511 = vmul.f32 %v484, %v503
        %v512 = vmul.f32 %v485, %v499
        %v513 = vmul.f32 %v486, %v503
        %v514 = vmul.f32 %v487, %v499
        %v515 = vmul.f32 %v488, %v503
        %v516 = vmul.f32 %v489, %v499
        %v517 = vmul.f32 %v490, %v503
        %v518 = vmul.f32 %v491, %v499
        %v519 = vmul.f32 %v492, %v503
        %v520 = vmul.f32 %v493, %v499
        %v521 = vmul.f32 %v494, %v503
        %v523 = vlaneseq
        %v524 = vshrl.u32 %v523, 7
        %v525 = vsub.s32 0, %v524
        %v526 = vrot.slane %v365, %v525
        %v527 = vlaneseq
        %v528 = vshrl.u32 %v527, 7
        %v529 = vsub.s32 1, %v528
        %v530 = vrot.slane %v365, %v529
        %v533 = vadd.f32 %v506, %v526
        %v534 = vadd.f32 %v507, %v530
        %v535 = vadd.f32 %v508, %v526
        %v536 = vadd.f32 %v509, %v530
        %v537 = vadd.f32 %v510, %v526
        %v538 = vadd.f32 %v511, %v530
        %v539 = vadd.f32 %v512, %v526
        %v540 = vadd.f32 %v513, %v530
        %v541 = vadd.f32 %v514, %v526
        %v542 = vadd.f32 %v515, %v530
        %v543 = vadd.f32 %v516, %v526
        %v544 = vadd.f32 %v517, %v530
        %v545 = vadd.f32 %v518, %v526
        %v546 = vadd.f32 %v519, %v530
        %v547 = vadd.f32 %v520, %v526
        %v548 = vadd.f32 %v521, %v530
        %549 = vst [vmem:[%s284] sm:$0xff] %v533
        %550 = vst [vmem:[%s284 + $0x8] sm:$0xff] %v534
        %551 = vst [vmem:[%s284 + $0x10] sm:$0xff] %v535
        %552 = vst [vmem:[%s284 + $0x18] sm:$0xff] %v536
        %553 = vst [vmem:[%s284 + $0x20] sm:$0xff] %v537
        %554 = vst [vmem:[%s284 + $0x28] sm:$0xff] %v538
        %555 = vst [vmem:[%s284 + $0x30] sm:$0xff] %v539
        %556 = vst [vmem:[%s284 + $0x38] sm:$0xff] %v540
        %557 = vst [vmem:[%s284 + $0x40] sm:$0xff] %v541
        %558 = vst [vmem:[%s284 + $0x48] sm:$0xff] %v542
        %559 = vst [vmem:[%s284 + $0x50] sm:$0xff] %v543
        %560 = vst [vmem:[%s284 + $0x58] sm:$0xff] %v544
        %561 = vst [vmem:[%s284 + $0x60] sm:$0xff] %v545
        %562 = vst [vmem:[%s284 + $0x68] sm:$0xff] %v546
        %563 = vst [vmem:[%s284 + $0x70] sm:$0xff] %v547
        %564 = vst [vmem:[%s284 + $0x78] sm:$0xff] %v548
        %s565 = sand.u32 %s148, 1
        %s566 = scalar_lea.sflag [#allocation4], %s565
        %s567 = sand.u32 %s148, 1
        %s568 = smul.addr %s567, 128
        %s569 = scalar_lea.vmem [#allocation7], %s568
        // Predicated region
        $region49: #{tpu_custom_call.1} parent=39 // pred_check
          %p570 = pneg %p158
        $region50: #{tpu_custom_call.1} parent=39 // pred_check_branch
          %572 = sbr.rel (%p570) target = $region52
        $region51: #{tpu_custom_call.1} parent=39 // pred_region
          %s573 = smul.u32 8, %s25
          %s575 = ssub.s32 2048, 2048
          %576 = vsyncadd %s566, %s575
          %s577 = smul.addr %s573, 2
          %s578 = smul.addr %s577, 128
          %s579 = scalar_lea.hbm %s5, %s578
          %s580 = sshll.u32 %s569, 4
          %s581 = int_to_ptr.vmem [resolvable:$true] %s580
          %586 = dma.vmem_to_hbm [thread:$0]  %s581, 2048, %s579, %s566, 256, 256, 16
        $region52: #{tpu_custom_call.1} parent=39 // pred_fallthru
          _
      $region40: #{tpu_custom_call.1} parent=5 // pred_fallthru
        _
      %p587 = scmp.le.s32.totalorder 2, %s20
      // Predicated region
      $region53: #{tpu_custom_call.1} parent=5 // pred_check
        %p588 = pneg %p587
      $region54: #{tpu_custom_call.1} parent=5 // pred_check_branch
        %590 = sbr.rel (%p588) target = $region56
      $region55: #{tpu_custom_call.1} parent=5 // pred_region
        %s591 = ssub.s32 %s20, 2
        // Predicated region
        $region57: #{tpu_custom_call.1} parent=55 // pred_check
          %p592 = pneg %p164
        $region58: #{tpu_custom_call.1} parent=55 // pred_check_branch
          %594 = sbr.rel (%p592) target = $region60
        $region59: #{tpu_custom_call.1} parent=55 // pred_region
          %s595 = sand.u32 %s149, 1
          %s596 = scalar_lea.sflag [#allocation4], %s595
          %s597 = sand.u32 %s149, 1
          %s598 = smul.addr %s597, 128
          %s599 = scalar_lea.vmem [#allocation7], %s598
          %600 = dma.done %s596, 2048
        $region60: #{tpu_custom_call.1} parent=55 // pred_fallthru
          _
      $region56: #{tpu_custom_call.1} parent=5 // pred_fallthru
        _
    $region6: #{tpu_custom_call.1} parent=1 // loop_footer
      %s24 = sadd.s32 1, %s20
    $region7: #{tpu_custom_call.1} parent=1 // loop_footer_branch
      %19 = sbr.rel target = $region3
    $region8: #{tpu_custom_call.1} parent=1 // loop_exit
      _
    %601 = vsyncpa [#allocation3], 1
    %s602 = scalar_lea.sflag [#allocation3], 1
    %603 = vsyncpa %s602, 1
    %604 = vsyncpa [#allocation6], 1
    %s605 = scalar_lea.sflag [#allocation6], 1
    %606 = vsyncpa %s605, 1
    %607 = vsyncpa [#allocation4], 1
    %s608 = scalar_lea.sflag [#allocation4], 1
    %609 = vsyncpa %s608, 1

</llo_original>
